<compile_context>
chip_gen: v7x
topology: tpu7x:2x2x1
jax: 0.10.0
libtpu: 0.0.40
codegen_flags: <defaults>
</compile_context>

<pallas_src>
import jax
import jax.numpy as jnp
from jax.experimental import pallas as pl
from jax.experimental.pallas import tpu as pltpu


def _pad_axis(a, axis, mult):
    """Zero-pad `axis` of `a` up to a multiple of `mult` (no-op if aligned)."""
    size = a.shape[axis]
    pad = (-size) % mult
    if pad == 0:
        return a
    widths = [(0, 0)] * a.ndim
    widths[axis] = (0, pad)
    return jnp.pad(a, widths)


def _mlp_task_kernel(task_ref, x_ref, w1_ref, b1_ref, w2_ref, b2_ref, o_ref,
                     acc_ref):
    # task_ref : (1,) int32 scalar-prefetch (selection already done in index_maps)
    # x_ref    : (B, D_in)      bf16, resident across the H grid
    # w1_ref   : (1, D_in, tH)  bf16, selected task, H-chunk k
    # b1_ref   : (1, 1, tH)     f32
    # w2_ref   : (1, tH, D_out) bf16, selected task, H-chunk k
    # b2_ref   : (1, 1, D_out)  f32
    # o_ref    : (B, D_out)     f32, written once on the last chunk
    # acc_ref  : (B, D_out)     f32 VMEM scratch accumulator
    del task_ref
    k = pl.program_id(0)

    @pl.when(k == 0)
    def _init():
        acc_ref[...] = jnp.zeros_like(acc_ref)

    # Layer 1 for this H-chunk: bf16 x bf16 on the MXU, f32 accumulate;
    # bias add + ReLU kept in f32 (v5e-friendly epilogue).
    h = jnp.dot(x_ref[...], w1_ref[0], preferred_element_type=jnp.float32)
    h = jnp.maximum(h + b1_ref[0], 0.0)

    # Layer 2 partial product for this chunk, accumulated into resident scratch.
    acc_ref[...] += jnp.dot(h.astype(w2_ref.dtype), w2_ref[0],
                            preferred_element_type=jnp.float32)

    @pl.when(k == pl.num_programs(0) - 1)
    def _finalize():
        o_ref[...] = (acc_ref[...] + b2_ref[0]).astype(o_ref.dtype)


def separate_models_forward(x, task_idx, w1, b1, w2, b2, *, th=128):
    """Forward of SeparateModels: run the per-task MLP selected by task_idx.

    x  : [B, D_in] (bf16 or f32)
    w1 : [n_tasks, D_in, H]  (stored pre-transposed vs. nn.Linear), b1 : [n_tasks, H]
    w2 : [n_tasks, H, D_out],                                       b2 : [n_tasks, D_out]
    Returns [B, D_out] float32.
    """
    B, D_in = x.shape
    n_tasks, _, H = w1.shape
    D_out = w2.shape[-1]

    # Lane-dense layout: zero-pad feature dims to multiples of 128 lanes and
    # batch to a multiple of 8 sublanes.  Zero padding is exact: padded input
    # columns multiply zero weights, padded H columns pass 0 through ReLU and
    # the second matmul, padded outputs are sliced off below.
    xp = _pad_axis(_pad_axis(x.astype(jnp.bfloat16), 1, 128), 0, 8)
    w1p = _pad_axis(_pad_axis(w1.astype(jnp.bfloat16), 1, 128), 2, 128)
    w2p = _pad_axis(_pad_axis(w2.astype(jnp.bfloat16), 1, 128), 2, 128)
    b1p = _pad_axis(b1.astype(jnp.float32), 1, 128)[:, None, :]
    b2p = _pad_axis(b2.astype(jnp.float32), 1, 128)[:, None, :]

    Bp, Dip = xp.shape
    Hp = w1p.shape[-1]
    Dop = w2p.shape[-1]
    th = min(th, Hp)
    assert Hp % th == 0, "padded H must be divisible by the H tile"
    n_chunks = Hp // th

    task = jnp.asarray([task_idx], dtype=jnp.int32)

    grid_spec = pltpu.PrefetchScalarGridSpec(
        num_scalar_prefetch=1,
        grid=(n_chunks,),
        in_specs=[
            pl.BlockSpec((Bp, Dip), lambda k, t: (0, 0)),        # x (resident)
            pl.BlockSpec((1, Dip, th), lambda k, t: (t[0], 0, k)),  # w1 chunk
            pl.BlockSpec((1, 1, th), lambda k, t: (t[0], 0, k)),    # b1 chunk
            pl.BlockSpec((1, th, Dop), lambda k, t: (t[0], k, 0)),  # w2 chunk
            pl.BlockSpec((1, 1, Dop), lambda k, t: (t[0], 0, 0)),   # b2
        ],
        out_specs=pl.BlockSpec((Bp, Dop), lambda k, t: (0, 0)),     # accumulator out
        scratch_shapes=[pltpu.VMEM((Bp, Dop), jnp.float32)],
    )

    cost = pl.CostEstimate(
        flops=2 * Bp * (Dip * Hp + Hp * Dop),
        transcendentals=0,
        bytes_accessed=(xp.size * xp.dtype.itemsize
                        + Dip * Hp * 2 + Hp * Dop * 2     # bf16 weight slices
                        + Hp * 4 + Dop * 4                # f32 bias slices
                        + Bp * Dop * 4),                  # f32 output
    )

    out = pl.pallas_call(
        _mlp_task_kernel,
        out_shape=jax.ShapeDtypeStruct((Bp, Dop), jnp.float32),
        grid_spec=grid_spec,
        compiler_params=pltpu.CompilerParams(
            dimension_semantics=("arbitrary",),  # H axis is a reduction
        ),
        cost_estimate=cost,
    )(task, xp, w1p, b1p, w2p, b2p)

    return out[:B, :D_out]


def _reference_forward(x, task_idx, w1, b1, w2, b2):
    """Pure-JAX reference mirroring the kernel's bf16-compute / f32-accumulate path."""
    h = jnp.dot(x, w1[task_idx], preferred_element_type=jnp.float32) + b1[task_idx]
    h = jnp.maximum(h, 0.0)
    y = jnp.dot(h.astype(jnp.bfloat16), w2[task_idx],
                preferred_element_type=jnp.float32) + b2[task_idx]
    return y


if __name__ == "__main__":
    # Small deterministic setup consistent with the module: n_tasks separate
    # per-task models; forward runs the one selected by set_task().
    n_tasks = 3
    B, D_in, H, D_out = 8, 128, 256, 128  # lane-aligned feature dims

    key = jax.random.PRNGKey(0)
    kx, kw1, kb1, kw2, kb2 = jax.random.split(key, 5)

    x = jax.random.normal(kx, (B, D_in), dtype=jnp.float32).astype(jnp.bfloat16)
    w1 = (jax.random.normal(kw1, (n_tasks, D_in, H), dtype=jnp.float32)
          * 0.05).astype(jnp.bfloat16)
    b1 = jax.random.normal(kb1, (n_tasks, H), dtype=jnp.float32) * 0.1
    w2 = (jax.random.normal(kw2, (n_tasks, H, D_out), dtype=jnp.float32)
          * 0.05).astype(jnp.bfloat16)
    b2 = jax.random.normal(kb2, (n_tasks, D_out), dtype=jnp.float32) * 0.1

    cur_task_idx = 1  # equivalent to model.set_task(1)

    out = separate_models_forward(x, cur_task_idx, w1, b1, w2, b2)
    out = jax.block_until_ready(out)

    ref = _reference_forward(x, cur_task_idx, w1, b1, w2, b2)
    assert out.shape == (B, D_out)
    assert jnp.allclose(out, ref, atol=1e-3, rtol=1e-3), "mismatch vs reference"

    print("KERNEL_OK")
</pallas_src>

<mosaic_0001>
module attributes {stable_mosaic.version = 11 : i64} {
  func.func @_mlp_task_kernel(%arg0: i32, %arg1: memref<1xi32, #tpu.memory_space<smem>>, %arg2: memref<8x128xbf16, #tpu.memory_space<vmem>>, %arg3: memref<1x128x128xbf16, #tpu.memory_space<vmem>>, %arg4: memref<1x1x128xf32, #tpu.memory_space<vmem>>, %arg5: memref<1x128x128xbf16, #tpu.memory_space<vmem>>, %arg6: memref<1x1x128xf32, #tpu.memory_space<vmem>>, %arg7: memref<8x128xf32, #tpu.memory_space<vmem>>, %arg8: memref<8x128xf32, #tpu.memory_space<vmem>>) attributes {dimension_semantics = [#tpu.dimension_semantics<arbitrary>], iteration_bounds = array<i64: 2>, scalar_prefetch = 1 : i64, scratch_operands = 1 : i64, tpu.core_type = #tpu.core_type<tc>, window_params = [{pipeline_mode = #tpu.pipeline_mode<synchronous>, transform_indices = @transform_0, window_bounds = array<i64: 8, 128>}, {transform_indices = @transform_1, window_bounds = array<i64: 1, 128, 128>}, {transform_indices = @transform_2, window_bounds = array<i64: 1, 1, 128>}, {transform_indices = @transform_3, window_bounds = array<i64: 1, 128, 128>}, {transform_indices = @transform_4, window_bounds = array<i64: 1, 1, 128>}, {pipeline_mode = #tpu.pipeline_mode<synchronous>, transform_indices = @transform_5, window_bounds = array<i64: 8, 128>}]} {
    %c0_i32 = arith.constant 0 : i32
    %0 = arith.cmpi eq, %arg0, %c0_i32 : i32
    %1 = arith.extui %0 : i1 to i32
    %c0_i32_0 = arith.constant 0 : i32
    %2 = arith.cmpi ne, %1, %c0_i32_0 : i32
    scf.if %2 {
      %cst_18 = arith.constant 0.000000e+00 : f32
      %23 = vector.broadcast %cst_18 : f32 to vector<8x128xf32>
      %c0_19 = arith.constant 0 : index
      %c0_20 = arith.constant 0 : index
      %24 = vector.load %arg8[%c0_19, %c0_20] : memref<8x128xf32, #tpu.memory_space<vmem>>, vector<8x128xf32>
      tpu.vector_store %arg8[%c0_19, %c0_20], %23 {strides = array<i32>} : memref<8x128xf32, #tpu.memory_space<vmem>>, vector<8x128xf32>,
    } else {
    }
    %c0 = arith.constant 0 : index
    %c0_1 = arith.constant 0 : index
    %3 = vector.load %arg2[%c0, %c0_1] : memref<8x128xbf16, #tpu.memory_space<vmem>>, vector<8x128xbf16>
    %c0_2 = arith.constant 0 : index
    %c0_3 = arith.constant 0 : index
    %c0_4 = arith.constant 0 : index
    %4 = vector.load %arg3[%c0_2, %c0_3, %c0_4] : memref<1x128x128xbf16, #tpu.memory_space<vmem>>, vector<1x128x128xbf16>
    %5 = vector.shape_cast %4 : vector<1x128x128xbf16> to vector<128x128xbf16>
    %cst = arith.constant dense<0.000000e+00> : vector<8x128xf32>
    %6 = tpu.matmul %3, %5, %cst {dimension_numbers = #tpu.dot_dimension_numbers<[1], [0], [0], [1], [0, 0, 1, 1], [], []>} : vector<8x128xbf16>, vector<128x128xbf16>, vector<8x128xf32> -> vector<8x128xf32>
    %c0_5 = arith.constant 0 : index
    %c0_6 = arith.constant 0 : index
    %c0_7 = arith.constant 0 : index
    %7 = vector.load %arg4[%c0_5, %c0_6, %c0_7] : memref<1x1x128xf32, #tpu.memory_space<vmem>>, vector<1x1x128xf32>
    %8 = vector.shape_cast %7 : vector<1x1x128xf32> to vector<1x128xf32>
    %9 = vector.broadcast %8 : vector<1x128xf32> to vector<8x128xf32>
    %10 = arith.addf %6, %9 : vector<8x128xf32>
    %cst_8 = arith.constant 0.000000e+00 : f32
    %11 = vector.broadcast %cst_8 : f32 to vector<8x128xf32>
    %12 = arith.maximumf %10, %11 : vector<8x128xf32>
    %c0_9 = arith.constant 0 : index
    %c0_10 = arith.constant 0 : index
    %13 = vector.load %arg8[%c0_9, %c0_10] : memref<8x128xf32, #tpu.memory_space<vmem>>, vector<8x128xf32>
    %14 = arith.truncf %12 : vector<8x128xf32> to vector<8x128xbf16>
    %c0_11 = arith.constant 0 : index
    %c0_12 = arith.constant 0 : index
    %c0_13 = arith.constant 0 : index
    %15 = vector.load %arg5[%c0_11, %c0_12, %c0_13] : memref<1x128x128xbf16, #tpu.memory_space<vmem>>, vector<1x128x128xbf16>
    %16 = vector.shape_cast %15 : vector<1x128x128xbf16> to vector<128x128xbf16>
    %cst_14 = arith.constant dense<0.000000e+00> : vector<8x128xf32>
    %17 = tpu.matmul %14, %16, %cst_14 {dimension_numbers = #tpu.dot_dimension_numbers<[1], [0], [0], [1], [0, 0, 1, 1], [], []>} : vector<8x128xbf16>, vector<128x128xbf16>, vector<8x128xf32> -> vector<8x128xf32>
    %18 = arith.addf %13, %17 : vector<8x128xf32>
    %c0_15 = arith.constant 0 : index
    %c0_16 = arith.constant 0 : index
    %19 = vector.load %arg8[%c0_15, %c0_16] : memref<8x128xf32, #tpu.memory_space<vmem>>, vector<8x128xf32>
    tpu.vector_store %arg8[%c0_15, %c0_16], %18 {strides = array<i32>} : memref<8x128xf32, #tpu.memory_space<vmem>>, vector<8x128xf32>,
    %c1_i32 = arith.constant 1 : i32
    %20 = arith.cmpi eq, %arg0, %c1_i32 : i32
    %21 = arith.extui %20 : i1 to i32
    %c0_i32_17 = arith.constant 0 : i32
    %22 = arith.cmpi ne, %21, %c0_i32_17 : i32
    scf.if %22 {
      %c0_18 = arith.constant 0 : index
      %c0_19 = arith.constant 0 : index
      %23 = vector.load %arg8[%c0_18, %c0_19] : memref<8x128xf32, #tpu.memory_space<vmem>>, vector<8x128xf32>
      %c0_20 = arith.constant 0 : index
      %c0_21 = arith.constant 0 : index
      %c0_22 = arith.constant 0 : index
      %24 = vector.load %arg6[%c0_20, %c0_21, %c0_22] : memref<1x1x128xf32, #tpu.memory_space<vmem>>, vector<1x1x128xf32>
      %25 = vector.shape_cast %24 : vector<1x1x128xf32> to vector<1x128xf32>
      %26 = vector.broadcast %25 : vector<1x128xf32> to vector<8x128xf32>
      %27 = arith.addf %23, %26 : vector<8x128xf32>
      %c0_23 = arith.constant 0 : index
      %c0_24 = arith.constant 0 : index
      %28 = vector.load %arg7[%c0_23, %c0_24] : memref<8x128xf32, #tpu.memory_space<vmem>>, vector<8x128xf32>
      tpu.vector_store %arg7[%c0_23, %c0_24], %27 {strides = array<i32>} : memref<8x128xf32, #tpu.memory_space<vmem>>, vector<8x128xf32>,
    } else {
    }
    return
  }
  func.func @transform_0(%arg0: i32, %arg1: memref<1xi32, #tpu.memory_space<smem>>) -> (i32, i32) {
    %c0_i32 = arith.constant 0 : i32
    %c0_i32_0 = arith.constant 0 : i32
    %c0_i32_1 = arith.constant 0 : i32
    return %c0_i32, %c0_i32_0 : i32, i32
  }
  func.func @transform_1(%arg0: i32, %arg1: memref<1xi32, #tpu.memory_space<smem>>) -> (i32, i32, i32) {
    %c0 = arith.constant 0 : index
    %0 = memref.load %arg1[%c0] : memref<1xi32, #tpu.memory_space<smem>>
    %c0_i32 = arith.constant 0 : i32
    %c0_i32_0 = arith.constant 0 : i32
    return %0, %c0_i32, %arg0 : i32, i32, i32
  }
  func.func @transform_2(%arg0: i32, %arg1: memref<1xi32, #tpu.memory_space<smem>>) -> (i32, i32, i32) {
    %c0 = arith.constant 0 : index
    %0 = memref.load %arg1[%c0] : memref<1xi32, #tpu.memory_space<smem>>
    %c0_i32 = arith.constant 0 : i32
    %c0_i32_0 = arith.constant 0 : i32
    return %0, %c0_i32, %arg0 : i32, i32, i32
  }
  func.func @transform_3(%arg0: i32, %arg1: memref<1xi32, #tpu.memory_space<smem>>) -> (i32, i32, i32) {
    %c0 = arith.constant 0 : index
    %0 = memref.load %arg1[%c0] : memref<1xi32, #tpu.memory_space<smem>>
    %c0_i32 = arith.constant 0 : i32
    %c0_i32_0 = arith.constant 0 : i32
    return %0, %arg0, %c0_i32 : i32, i32, i32
  }
  func.func @transform_4(%arg0: i32, %arg1: memref<1xi32, #tpu.memory_space<smem>>) -> (i32, i32, i32) {
    %c0 = arith.constant 0 : index
    %0 = memref.load %arg1[%c0] : memref<1xi32, #tpu.memory_space<smem>>
    %c0_i32 = arith.constant 0 : i32
    %c0_i32_0 = arith.constant 0 : i32
    %c0_i32_1 = arith.constant 0 : i32
    return %0, %c0_i32, %c0_i32_0 : i32, i32, i32
  }
  func.func @transform_5(%arg0: i32, %arg1: memref<1xi32, #tpu.memory_space<smem>>) -> (i32, i32) {
    %c0_i32 = arith.constant 0 : i32
    %c0_i32_0 = arith.constant 0 : i32
    %c0_i32_1 = arith.constant 0 : i32
    return %c0_i32, %c0_i32_0 : i32, i32
  }
}

</mosaic_0001>

<llo_original>
// kernel: tpu_custom_call.1
$region0: #{tpu_custom_call.1}
  #allocation0 [shape = 'u32[]', space=smem, size = 0x4, offset = 0x4, fixed_abs, tag = 'smem constant byte address 0x4 - core index']
  #allocation1 [shape = 'u32[144,128]{1,0:T(1,128)}', space=vmem, size = 0x12000, scoped, tag = 'internal scratch']
  #allocation2 [shape = 'f32[8,128]{1,0:T(8,128)}', space=vmem, size = 0x1000, scoped, tag = 'scratch operand']
  #allocation3 [shape = 's32[1]{0}', space=sflag, size = 0x4, scoped, tag = 'scoped memory for tpu_custom_call.1']
  #allocation4 [shape = 's32[1]{0:T(128)S(6)}', space=smem, size = 0x200, scoped, tag = 'prefetched SMEM operand 0']
  %s0 = inlined_call_operand.<no memory space> [shape: s32[1], index: 0, kind: input, shape index: {}]
  %s1 = inlined_call_operand.hbm [shape: bf16[8,128], index: 1, kind: input, shape index: {}]
  %s2 = inlined_call_operand.hbm [shape: bf16[3,128,256], index: 2, kind: input, shape index: {}]
  %s3 = inlined_call_operand.vmem [shape: f32[3,1,256], index: 3, kind: input, shape index: {}]
  %s4 = inlined_call_operand.hbm [shape: bf16[3,256,128], index: 4, kind: input, shape index: {}]
  %s5 = inlined_call_operand.vmem [shape: f32[3,1,128], index: 5, kind: input, shape index: {}]
  %s6 = inlined_call_operand.hbm [shape: f32[8,128], index: 6, kind: output, shape index: {}]
  %s7 = sld [smem:[#allocation0]]
  $region73: #{tpu_custom_call.1} parent=0
    _
  %s9 = ssub.s32 1, %s7
  %s10 = scalar_select 0, %s9, %s7
  %11 = sst [smem:[#allocation4]] %s0
  $region1: #{tpu_custom_call.1} parent=0
    #allocation5 [shape = 'u8[2048]{0}', space=vmem, size = 0x800, scoped, tag = 'input window, operand 1, single buffered']
    #allocation6 [shape = 's32[2]{0}', space=sflag, size = 0x8, scoped, tag = 'scoped memory for tpu_custom_call.1']
    #allocation7 [shape = 's32[2]{0}', space=sflag, size = 0x8, scoped, tag = 'scoped memory for tpu_custom_call.1']
    #allocation8 [shape = 'u8[65536]{0}', space=vmem, size = 0x10000, scoped, tag = 'input window, operand 2']
    #allocation9 [shape = 's32[2]{0}', space=sflag, size = 0x8, scoped, tag = 'scoped memory for tpu_custom_call.1']
    #allocation10 [shape = 'u8[65536]{0}', space=vmem, size = 0x10000, scoped, tag = 'input window, operand 4']
    #allocation11 [shape = 'u8[4096]{0}', space=vmem, size = 0x1000, scoped, tag = 'output window, operand 0, single buffered']
    %12 = vsyncpa [#allocation6], 0
    %13 = vsyncpa [#allocation9], 0
    %s14 = scalar_lea.sflag [#allocation9], 1
    %15 = vsyncpa %s14, 0
    %16 = vsyncpa [#allocation7], 0
    loop: start=0, step=1, limit=4
    $region2: #{tpu_custom_call.1} parent=1 // loop_pre_header
      _
    $region3: #{tpu_custom_call.1} parent=1 // loop_header
      %s18 = sphi 0, %s22
      %p19 = scmp.ge.s32.totalorder %s18, 4
      %s26 = sphi 0, %s26
      %s28 = sphi 0, %s26
      %s29 = sphi 0, %s28
      %s43 = sphi 0, %s29
      %s53 = sphi 0, %s55
      %s56 = sphi 0, %s53
      %s57 = sphi 0, %s56
      %s73 = sphi 0, %s57
      %s83 = sphi 0, %s85
      %s86 = sphi 0, %s83
      %s87 = sphi 0, %s86
      %s103 = sphi 0, %s87
      %s113 = sphi 0, %s115
      %s116 = sphi 0, %s113
      %s117 = sphi 0, %s116
      %s133 = sphi 0, %s117
      %s141 = sphi 0, %s143
      %s144 = sphi 0, %s141
      %s145 = sphi 0, %s144
      %s161 = sphi 0, %s145
      %s165 = sphi 0, %s165
      %s167 = sphi 0, %s165
      %s168 = sphi 0, %s167
      %s182 = sphi 0, %s168
    $region4: #{tpu_custom_call.1} parent=1 // loop_header_branch
      %21 = sbr.rel (%p19) target = $region8
    $region5: #{tpu_custom_call.1} parent=1 // loop_body
      %s23 = ssub.s32 %s18, 1
      %s24 = ssub.s32 %s18, 2
      %s25 = sadd.s32 %s18, 1
      %s27 = sadd.s32 %s26, 1
      %p30 = scmp.eq.s32.totalorder %s18, 1
      %p31 = scmp.ne.s32.totalorder %s26, %s28
      %p32 = scmp.eq.s32.totalorder %s18, 0
      %p33 = por %p31, %p32
      %p34 = scmp.ne.s32.totalorder %s26, %s28
      %p35 = scmp.eq.s32.totalorder %s23, 1
      %p36 = por %p34, %p35
      %p37 = scmp.ne.s32.totalorder %s28, %s29
      %p38 = scmp.eq.s32.totalorder %s23, 0
      %p39 = por %p37, %p38
      %p40 = scmp.ne.s32.totalorder %s28, %s29
      %p41 = scmp.eq.s32.totalorder %s24, 1
      %p42 = por %p40, %p41
      %p44 = scmp.ne.s32.totalorder %s29, %s43
      %p45 = scmp.eq.s32.totalorder %s24, 0
      %p46 = por %p44, %p45
      %s47 = sld [smem:[#allocation4]]
      %s48 = sld [smem:[#allocation4]]
      %s49 = ssub.s32 %s47, %s48
      %s50 = ssub.s32 %s18, %s25
      %s51 = sor.u32 %s49, %s50
      %p52 = scmp.eq.s32.totalorder %s51, 0
      %s54 = sadd.s32 %s53, 1
      %s55 = scalar_select %p52, %s53, %s54
      %p58 = pneg %p52
      %p59 = scmp.eq.s32.totalorder %s18, 1
      %p60 = por %p58, %p59
      %p61 = scmp.ne.s32.totalorder %s53, %s56
      %p62 = scmp.eq.s32.totalorder %s18, 0
      %p63 = por %p61, %p62
      %p64 = scmp.ne.s32.totalorder %s53, %s56
      %p65 = scmp.eq.s32.totalorder %s23, 1
      %p66 = por %p64, %p65
      %p67 = scmp.ne.s32.totalorder %s56, %s57
      %p68 = scmp.eq.s32.totalorder %s23, 0
      %p69 = por %p67, %p68
      %p70 = scmp.ne.s32.totalorder %s56, %s57
      %p71 = scmp.eq.s32.totalorder %s24, 1
      %p72 = por %p70, %p71
      %p74 = scmp.ne.s32.totalorder %s57, %s73
      %p75 = scmp.eq.s32.totalorder %s24, 0
      %p76 = por %p74, %p75
      %s77 = sld [smem:[#allocation4]]
      %s78 = sld [smem:[#allocation4]]
      %s79 = ssub.s32 %s77, %s78
      %s80 = ssub.s32 %s18, %s25
      %s81 = sor.u32 %s79, %s80
      %p82 = scmp.eq.s32.totalorder %s81, 0
      %s84 = sadd.s32 %s83, 1
      %s85 = scalar_select %p82, %s83, %s84
      %p88 = pneg %p82
      %p89 = scmp.eq.s32.totalorder %s18, 1
      %p90 = por %p88, %p89
      %p91 = scmp.ne.s32.totalorder %s83, %s86
      %p92 = scmp.eq.s32.totalorder %s18, 0
      %p93 = por %p91, %p92
      %p94 = scmp.ne.s32.totalorder %s83, %s86
      %p95 = scmp.eq.s32.totalorder %s23, 1
      %p96 = por %p94, %p95
      %p97 = scmp.ne.s32.totalorder %s86, %s87
      %p98 = scmp.eq.s32.totalorder %s23, 0
      %p99 = por %p97, %p98
      %p100 = scmp.ne.s32.totalorder %s86, %s87
      %p101 = scmp.eq.s32.totalorder %s24, 1
      %p102 = por %p100, %p101
      %p104 = scmp.ne.s32.totalorder %s87, %s103
      %p105 = scmp.eq.s32.totalorder %s24, 0
      %p106 = por %p104, %p105
      %s107 = sld [smem:[#allocation4]]
      %s108 = sld [smem:[#allocation4]]
      %s109 = ssub.s32 %s107, %s108
      %s110 = ssub.s32 %s18, %s25
      %s111 = sor.u32 %s109, %s110
      %p112 = scmp.eq.s32.totalorder %s111, 0
      %s114 = sadd.s32 %s113, 1
      %s115 = scalar_select %p112, %s113, %s114
      %p118 = pneg %p112
      %p119 = scmp.eq.s32.totalorder %s18, 1
      %p120 = por %p118, %p119
      %p121 = scmp.ne.s32.totalorder %s113, %s116
      %p122 = scmp.eq.s32.totalorder %s18, 0
      %p123 = por %p121, %p122
      %p124 = scmp.ne.s32.totalorder %s113, %s116
      %p125 = scmp.eq.s32.totalorder %s23, 1
      %p126 = por %p124, %p125
      %p127 = scmp.ne.s32.totalorder %s116, %s117
      %p128 = scmp.eq.s32.totalorder %s23, 0
      %p129 = por %p127, %p128
      %p130 = scmp.ne.s32.totalorder %s116, %s117
      %p131 = scmp.eq.s32.totalorder %s24, 1
      %p132 = por %p130, %p131
      %p134 = scmp.ne.s32.totalorder %s117, %s133
      %p135 = scmp.eq.s32.totalorder %s24, 0
      %p136 = por %p134, %p135
      %s137 = sld [smem:[#allocation4]]
      %s138 = sld [smem:[#allocation4]]
      %s139 = ssub.s32 %s137, %s138
      %p140 = scmp.eq.s32.totalorder %s139, 0
      %s142 = sadd.s32 %s141, 1
      %s143 = scalar_select %p140, %s141, %s142
      %p146 = pneg %p140
      %p147 = scmp.eq.s32.totalorder %s18, 1
      %p148 = por %p146, %p147
      %p149 = scmp.ne.s32.totalorder %s141, %s144
      %p150 = scmp.eq.s32.totalorder %s18, 0
      %p151 = por %p149, %p150
      %p152 = scmp.ne.s32.totalorder %s141, %s144
      %p153 = scmp.eq.s32.totalorder %s23, 1
      %p154 = por %p152, %p153
      %p155 = scmp.ne.s32.totalorder %s144, %s145
      %p156 = scmp.eq.s32.totalorder %s23, 0
      %p157 = por %p155, %p156
      %p158 = scmp.ne.s32.totalorder %s144, %s145
      %p159 = scmp.eq.s32.totalorder %s24, 1
      %p160 = por %p158, %p159
      %p162 = scmp.ne.s32.totalorder %s145, %s161
      %p163 = scmp.eq.s32.totalorder %s24, 0
      %p164 = por %p162, %p163
      %s166 = sadd.s32 %s165, 1
      %p169 = scmp.eq.s32.totalorder %s18, 1
      %p170 = scmp.ne.s32.totalorder %s165, %s167
      %p171 = scmp.eq.s32.totalorder %s18, 0
      %p172 = por %p170, %p171
      %p173 = scmp.ne.s32.totalorder %s165, %s167
      %p174 = scmp.eq.s32.totalorder %s23, 1
      %p175 = por %p173, %p174
      %p176 = scmp.ne.s32.totalorder %s167, %s168
      %p177 = scmp.eq.s32.totalorder %s23, 0
      %p178 = por %p176, %p177
      %p179 = scmp.ne.s32.totalorder %s167, %s168
      %p180 = scmp.eq.s32.totalorder %s24, 1
      %p181 = por %p179, %p180
      %p183 = scmp.ne.s32.totalorder %s168, %s182
      %p184 = scmp.eq.s32.totalorder %s24, 0
      %p185 = por %p183, %p184
      %p186 = scmp.le.s32.totalorder 1, %s18
      %p187 = scmp.lt.s32.totalorder %s18, 3
      %p188 = pnand %p186, %p187
      %p189 = pneg %p188
      // Predicated region
      $region9: #{tpu_custom_call.1} parent=5 // pred_check
        _
      $region10: #{tpu_custom_call.1} parent=5 // pred_check_branch
        %191 = sbr.rel (%p188) target = $region12
      $region11: #{tpu_custom_call.1} parent=5 // pred_region
        %s192 = ssub.s32 %s18, 1
        // Predicated region
        $region13: #{tpu_custom_call.1} parent=11 // pred_check
          %p193 = pneg %p39
        $region14: #{tpu_custom_call.1} parent=11 // pred_check_branch
          %195 = sbr.rel (%p193) target = $region16
        $region15: #{tpu_custom_call.1} parent=11 // pred_region
          %s197 = ssub.s32 64, 64
          %198 = vsyncadd [#allocation6], %s197
          %s200 = sshll.u32 [#allocation5], 4
          %s201 = int_to_ptr.vmem [resolvable:$true] %s200
          %203 = dma.hbm_to_vmem [thread:$0]  %s1, 64, %s201, [#allocation6]
        $region16: #{tpu_custom_call.1} parent=11 // pred_fallthru
          _
        // Predicated region
        $region17: #{tpu_custom_call.1} parent=11 // pred_check
          %p204 = pneg %p157
        $region18: #{tpu_custom_call.1} parent=11 // pred_check_branch
          %206 = sbr.rel (%p204) target = $region20
        $region19: #{tpu_custom_call.1} parent=11 // pred_region
          %s207 = sld [smem:[#allocation4]]
          %p208 = scmp.lt.s32.totalorder %s207, 2
          %s209 = scalar_select %p208, %s207, 2
          %s210 = scalar_lea.vmem %s5, %s209
          %s211 = sld [smem:[#allocation4]]
        $region20: #{tpu_custom_call.1} parent=11 // pred_fallthru
          _
      $region12: #{tpu_custom_call.1} parent=5 // pred_fallthru
        _
      %p212 = scmp.lt.s32.totalorder %s18, 2
      // Predicated region
      $region21: #{tpu_custom_call.1} parent=5 // pred_check
        %p213 = pneg %p212
      $region22: #{tpu_custom_call.1} parent=5 // pred_check_branch
        %215 = sbr.rel (%p213) target = $region24
      $region23: #{tpu_custom_call.1} parent=5 // pred_region
        // Predicated region
        $region25: #{tpu_custom_call.1} parent=23 // pred_check
          %p216 = pneg %p63
        $region26: #{tpu_custom_call.1} parent=23 // pred_check_branch
          %218 = sbr.rel (%p216) target = $region28
        $region27: #{tpu_custom_call.1} parent=23 // pred_region
          %s219 = sand.u32 %s18, 1
          %s220 = scalar_lea.sflag [#allocation9], %s219
          %s221 = sand.u32 %s53, 1
          %s222 = smul.addr %s221, 64
          %s223 = scalar_lea.vmem [#allocation8], %s222
          %s224 = sld [smem:[#allocation4]]
          %s226 = ssub.s32 1024, 1024
          %227 = vsyncadd %s220, %s226
          %s228 = smul.addr %s224, 32
          %s229 = sadd.s32 %s18, %s228
          %s230 = smul.addr %s229, 64
          %s231 = scalar_lea.hbm %s2, %s230
          %s232 = sshll.u32 %s223, 4
          %s233 = int_to_ptr.vmem [resolvable:$true] %s232
          %238 = dma.hbm_to_vmem [thread:$0]  %s231, 1024, %s233, %s220, 128, 64, 4
        $region28: #{tpu_custom_call.1} parent=23 // pred_fallthru
          _
        // Predicated region
        $region29: #{tpu_custom_call.1} parent=23 // pred_check
          %p239 = pneg %p93
        $region30: #{tpu_custom_call.1} parent=23 // pred_check_branch
          %241 = sbr.rel (%p239) target = $region32
        $region31: #{tpu_custom_call.1} parent=23 // pred_region
          %s242 = sld [smem:[#allocation4]]
          %p243 = scmp.lt.s32.totalorder %s242, 2
          %s244 = scalar_select %p243, %s242, 2
          %p245 = scmp.lt.s32.totalorder %s18, 1
          %s246 = scalar_select %p245, %s18, 1
          %s247 = smul.addr %s244, 2
          %s248 = sadd.s32 %s246, %s247
          %s249 = scalar_lea.vmem %s3, %s248
          %s250 = sld [smem:[#allocation4]]
        $region32: #{tpu_custom_call.1} parent=23 // pred_fallthru
          _
        // Predicated region
        $region33: #{tpu_custom_call.1} parent=23 // pred_check
          %p251 = pneg %p123
        $region34: #{tpu_custom_call.1} parent=23 // pred_check_branch
          %253 = sbr.rel (%p251) target = $region36
        $region35: #{tpu_custom_call.1} parent=23 // pred_region
          %s254 = sand.u32 %s18, 1
          %s255 = scalar_lea.sflag [#allocation9], %s254
          %s256 = sand.u32 %s113, 1
          %s257 = smul.addr %s256, 64
          %s258 = scalar_lea.vmem [#allocation10], %s257
          %s259 = sld [smem:[#allocation4]]
          %s260 = smul.u32 16, %s18
          %s262 = ssub.s32 1024, 1024
          %263 = vsyncadd %s255, %s262
          %s264 = smul.addr %s259, 32
          %s265 = sadd.s32 %s260, %s264
          %s266 = smul.addr %s265, 64
          %s267 = scalar_lea.hbm %s4, %s266
          %s268 = sshll.u32 %s258, 4
          %s269 = int_to_ptr.vmem [resolvable:$true] %s268
          %274 = dma.hbm_to_vmem [thread:$0]  %s267, 1024, %s269, %s255, 64, 64, 4
        $region36: #{tpu_custom_call.1} parent=23 // pred_fallthru
          _
      $region24: #{tpu_custom_call.1} parent=5 // pred_fallthru
        _
      %p275 = scmp.le.s32.totalorder 1, %s18
      %p276 = scmp.lt.s32.totalorder %s18, 3
      %p277 = pnand %p275, %p276
      %p278 = pneg %p277
      // Predicated region
      $region37: #{tpu_custom_call.1} parent=5 // pred_check
        _
      $region38: #{tpu_custom_call.1} parent=5 // pred_check_branch
        %280 = sbr.rel (%p277) target = $region40
      $region39: #{tpu_custom_call.1} parent=5 // pred_region
        %s281 = ssub.s32 %s18, 1
        // Predicated region
        $region41: #{tpu_custom_call.1} parent=39 // pred_check
          %p282 = pneg %p39
        $region42: #{tpu_custom_call.1} parent=39 // pred_check_branch
          %284 = sbr.rel (%p282) target = $region44
        $region43: #{tpu_custom_call.1} parent=39 // pred_region
          %285 = dma.done [#allocation6], 64
        $region44: #{tpu_custom_call.1} parent=39 // pred_fallthru
          _
        %s286 = sand.u32 %s23, 1
        %s287 = scalar_lea.sflag [#allocation9], %s286
        %s288 = sand.u32 %s56, 1
        %s289 = smul.addr %s288, 64
        %s290 = scalar_lea.vmem [#allocation8], %s289
        // Predicated region
        $region45: #{tpu_custom_call.1} parent=39 // pred_check
          %p291 = pneg %p69
        $region46: #{tpu_custom_call.1} parent=39 // pred_check_branch
          %293 = sbr.rel (%p291) target = $region48
        $region47: #{tpu_custom_call.1} parent=39 // pred_region
          %294 = dma.done %s287, 1024
        $region48: #{tpu_custom_call.1} parent=39 // pred_fallthru
          _
        %s295 = sand.u32 %s23, 1
        %s296 = scalar_lea.sflag [#allocation9], %s295
        %s297 = sand.u32 %s116, 1
        %s298 = smul.addr %s297, 64
        %s299 = scalar_lea.vmem [#allocation10], %s298
        // Predicated region
        $region49: #{tpu_custom_call.1} parent=39 // pred_check
          %p300 = pneg %p129
        $region50: #{tpu_custom_call.1} parent=39 // pred_check_branch
          %302 = sbr.rel (%p300) target = $region52
        $region51: #{tpu_custom_call.1} parent=39 // pred_region
          %303 = dma.done %s296, 1024
        $region52: #{tpu_custom_call.1} parent=39 // pred_fallthru
          _
        %p304 = pneg %p39
        %p305 = pneg %p36
        %s306 = sand.u32 %s23, 1
        %s307 = scalar_lea.sflag [#allocation9], %s306
        %s308 = sand.u32 %s56, 1
        %s309 = smul.addr %s308, 64
        %s310 = scalar_lea.vmem [#allocation8], %s309
        %p311 = pneg %p69
        %p312 = pneg %p66
        %s313 = sld [smem:[#allocation4]]
        %p314 = scmp.lt.s32.totalorder %s313, 2
        %s315 = scalar_select %p314, %s313, 2
        %p316 = scmp.lt.s32.totalorder %s23, 1
        %s317 = scalar_select %p316, %s23, 1
        %s318 = smul.addr %s315, 2
        %s319 = sadd.s32 %s317, %s318
        %s320 = scalar_lea.vmem %s3, %s319
        %p321 = pneg %p99
        %p322 = pneg %p96
        %s323 = sand.u32 %s23, 1
        %s324 = scalar_lea.sflag [#allocation9], %s323
        %s325 = sand.u32 %s116, 1
        %s326 = smul.addr %s325, 64
        %s327 = scalar_lea.vmem [#allocation10], %s326
        %p328 = pneg %p129
        %p329 = pneg %p126
        %s330 = sld [smem:[#allocation4]]
        %p331 = scmp.lt.s32.totalorder %s330, 2
        %s332 = scalar_select %p331, %s330, 2
        %s333 = scalar_lea.vmem %s5, %s332
        %p334 = pneg %p157
        %p335 = pneg %p154
        %p336 = pneg %p178
        %p337 = pneg %p175
        %s338 = sld [smem:[#allocation4]]
        %s339 = sld [smem:[#allocation4]]
        %p340 = scmp.lt.s32.totalorder %s339, 2
        %s341 = scalar_select %p340, %s339, 2
        %p342 = scmp.lt.s32.totalorder %s23, 1
        %s343 = scalar_select %p342, %s23, 1
        %s344 = smul.addr %s341, 2
        %s345 = sadd.s32 %s343, %s344
        %s346 = scalar_lea.vmem %s3, %s345
        %s347 = sld [smem:[#allocation4]]
        %s348 = sld [smem:[#allocation4]]
        %s349 = smul.u32 16, %s23
        %s350 = sld [smem:[#allocation4]]
        %p351 = scmp.lt.s32.totalorder %s350, 2
        %s352 = scalar_select %p351, %s350, 2
        %s353 = scalar_lea.vmem %s5, %s352
        %s354 = sld [smem:[#allocation4]]
        %p356 = scmp.eq.s32.totalorder %s23, 0
        // Predicated region
        $region53: #{tpu_custom_call.1} parent=39 // pred_check
          %p357 = pneg %p356
        $region54: #{tpu_custom_call.1} parent=39 // pred_check_branch
          %359 = sbr.rel (%p357) target = $region56
        $region55: #{tpu_custom_call.1} parent=39 // pred_region
          %360 = vst [vmem:[#allocation2] sm:$0xff] 0.0
        $region56: #{tpu_custom_call.1} parent=39 // pred_fallthru
          _
        %v361 = vld [vmem:[#allocation5] sm:$0xf]
        %v362 = vld [vmem:[%s290] sm:$0xf]
        %v363 = vld [vmem:[%s290 + $0x4] sm:$0xf]
        %v364 = vld [vmem:[%s290 + $0x8] sm:$0xf]
        %v365 = vld [vmem:[%s290 + $0xc] sm:$0xf]
        %v366 = vld [vmem:[%s290 + $0x10] sm:$0xf]
        %v367 = vld [vmem:[%s290 + $0x14] sm:$0xf]
        %v368 = vld [vmem:[%s290 + $0x18] sm:$0xf]
        %v369 = vld [vmem:[%s290 + $0x1c] sm:$0xf]
        %v370 = vld [vmem:[%s290 + $0x20] sm:$0xf]
        %v371 = vld [vmem:[%s290 + $0x24] sm:$0xf]
        %v372 = vld [vmem:[%s290 + $0x28] sm:$0xf]
        %v373 = vld [vmem:[%s290 + $0x2c] sm:$0xf]
        %v374 = vld [vmem:[%s290 + $0x30] sm:$0xf]
        %v375 = vld [vmem:[%s290 + $0x34] sm:$0xf]
        %v376 = vld [vmem:[%s290 + $0x38] sm:$0xf]
        %v377 = vld [vmem:[%s290 + $0x3c] sm:$0xf]
        %v378 = vld [vmem:[%s346] sm:$0x1]
        %v380 = vlaneseq
        %v381 = vshrl.u32 %v380, 7
        %v382 = vsub.s32 0, %v381
        %v383 = vrot.slane %v378, %v382
        %v401 = vunpack.c.l.b16 %v362
        %v402 = vunpack.c.l.b16 %v363
        %v403 = vunpack.c.l.b16 %v364
        %v404 = vunpack.c.l.b16 %v365
        %v405 = vunpack.c.l.b16 %v366
        %v406 = vunpack.c.l.b16 %v367
        %v407 = vunpack.c.l.b16 %v368
        %v408 = vunpack.c.l.b16 %v369
        %v409 = vunpack.c.l.b16 %v370
        %v410 = vunpack.c.l.b16 %v371
        %v411 = vunpack.c.l.b16 %v372
        %v412 = vunpack.c.l.b16 %v373
        %v413 = vunpack.c.l.b16 %v374
        %v414 = vunpack.c.l.b16 %v375
        %v415 = vunpack.c.l.b16 %v376
        %v416 = vunpack.c.l.b16 %v377
        %v417 = vpack.c.b16 %v402, %v401
        %v418 = vpack.c.b16 %v404, %v403
        %v419 = vpack.c.b16 %v406, %v405
        %v420 = vpack.c.b16 %v408, %v407
        %v421 = vpack.c.b16 %v410, %v409
        %v422 = vpack.c.b16 %v412, %v411
        %v423 = vpack.c.b16 %v414, %v413
        %v424 = vpack.c.b16 %v416, %v415
        %433 = vmatprep.subr.bf16.mxu0 0
        %434 = vmatpush1.bf16.msra.mxu0 %v417
        %435 = vmatprep.subr.bf16.mxu0 0
        %436 = vmatpush1.bf16.msra.mxu0 %v418
        %437 = vmatprep.subr.bf16.mxu0 0
        %438 = vmatpush1.bf16.msra.mxu0 %v419
        %439 = vmatprep.subr.bf16.mxu0 0
        %440 = vmatpush1.bf16.msra.mxu0 %v420
        %441 = vmatprep.subr.bf16.mxu0 0
        %442 = vmatpush1.bf16.msra.mxu0 %v421
        %443 = vmatprep.subr.bf16.mxu0 0
        %444 = vmatpush1.bf16.msra.mxu0 %v422
        %445 = vmatprep.subr.bf16.mxu0 0
        %446 = vmatpush1.bf16.msra.mxu0 %v423
        %447 = vmatprep.subr.bf16.mxu0 0
        %448 = vmatpush1.bf16.msra.mxu0 %v424
        %449 = vmatprep.subr.bf16.mxu0 0
        %450 = vmatpush1.bf16.msra.mxu0 0
        %451 = vmatprep.subr.bf16.mxu0 0
        %452 = vmatpush1.bf16.msra.mxu0 0
        %453 = vmatprep.subr.bf16.mxu0 0
        %454 = vmatpush1.bf16.msra.mxu0 0
        %455 = vmatprep.subr.bf16.mxu0 0
        %456 = vmatpush1.bf16.msra.mxu0 0
        %457 = vmatprep.subr.bf16.mxu0 0
        %458 = vmatpush1.bf16.msra.mxu0 0
        %459 = vmatprep.subr.bf16.mxu0 0
        %460 = vmatpush1.bf16.msra.mxu0 0
        %461 = vmatprep.subr.bf16.mxu0 0
        %462 = vmatpush1.bf16.msra.mxu0 0
        %463 = vmatprep.subr.bf16.mxu0 0
        %464 = vmatpush1.bf16.msra.mxu0 0
        %465 = vmatprep.mubr.bf16.mxu0 0
        %466 = vmatmul.mubr.bf16.gmra.mrb[0].mxu0 %v361
        %v467 = vpop.f32.mrb[0].mxu0
        %v468 = vadd.f32 %v383, %v467
        %v469 = vpop.f32.mrb[0].mxu0
        %v470 = vpop.f32.mrb[0].mxu0
        %v471 = vpop.f32.mrb[0].mxu0
        %472 = vdwg.mxu0
        %v473 = vmax.f32 %v468, 0.0
        %v474 = vld [vmem:[#allocation2] sm:$0xff]
        %v475 = vpack.c.bf16 %v473, %v473
        %v476 = vld [vmem:[%s299] sm:$0xf]
        %v477 = vld [vmem:[%s299 + $0x4] sm:$0xf]
        %v478 = vld [vmem:[%s299 + $0x8] sm:$0xf]
        %v479 = vld [vmem:[%s299 + $0xc] sm:$0xf]
        %v480 = vld [vmem:[%s299 + $0x10] sm:$0xf]
        %v481 = vld [vmem:[%s299 + $0x14] sm:$0xf]
        %v482 = vld [vmem:[%s299 + $0x18] sm:$0xf]
        %v483 = vld [vmem:[%s299 + $0x1c] sm:$0xf]
        %v484 = vld [vmem:[%s299 + $0x20] sm:$0xf]
        %v485 = vld [vmem:[%s299 + $0x24] sm:$0xf]
        %v486 = vld [vmem:[%s299 + $0x28] sm:$0xf]
        %v487 = vld [vmem:[%s299 + $0x2c] sm:$0xf]
        %v488 = vld [vmem:[%s299 + $0x30] sm:$0xf]
        %v489 = vld [vmem:[%s299 + $0x34] sm:$0xf]
        %v490 = vld [vmem:[%s299 + $0x38] sm:$0xf]
        %v491 = vld [vmem:[%s299 + $0x3c] sm:$0xf]
        %v508 = vunpack.c.l.b16 %v476
        %v509 = vunpack.c.l.b16 %v477
        %v510 = vunpack.c.l.b16 %v478
        %v511 = vunpack.c.l.b16 %v479
        %v512 = vunpack.c.l.b16 %v480
        %v513 = vunpack.c.l.b16 %v481
        %v514 = vunpack.c.l.b16 %v482
        %v515 = vunpack.c.l.b16 %v483
        %v516 = vunpack.c.l.b16 %v484
        %v517 = vunpack.c.l.b16 %v485
        %v518 = vunpack.c.l.b16 %v486
        %v519 = vunpack.c.l.b16 %v487
        %v520 = vunpack.c.l.b16 %v488
        %v521 = vunpack.c.l.b16 %v489
        %v522 = vunpack.c.l.b16 %v490
        %v523 = vunpack.c.l.b16 %v491
        %v524 = vpack.c.b16 %v509, %v508
        %v525 = vpack.c.b16 %v511, %v510
        %v526 = vpack.c.b16 %v513, %v512
        %v527 = vpack.c.b16 %v515, %v514
        %v528 = vpack.c.b16 %v517, %v516
        %v529 = vpack.c.b16 %v519, %v518
        %v530 = vpack.c.b16 %v521, %v520
        %v531 = vpack.c.b16 %v523, %v522
        %540 = vmatprep.subr.bf16.mxu0 0
        %541 = vmatpush1.bf16.msra.mxu0 %v524
        %542 = vmatprep.subr.bf16.mxu0 0
        %543 = vmatpush1.bf16.msra.mxu0 %v525
        %544 = vmatprep.subr.bf16.mxu0 0
        %545 = vmatpush1.bf16.msra.mxu0 %v526
        %546 = vmatprep.subr.bf16.mxu0 0
        %547 = vmatpush1.bf16.msra.mxu0 %v527
        %548 = vmatprep.subr.bf16.mxu0 0
        %549 = vmatpush1.bf16.msra.mxu0 %v528
        %550 = vmatprep.subr.bf16.mxu0 0
        %551 = vmatpush1.bf16.msra.mxu0 %v529
        %552 = vmatprep.subr.bf16.mxu0 0
        %553 = vmatpush1.bf16.msra.mxu0 %v530
        %554 = vmatprep.subr.bf16.mxu0 0
        %555 = vmatpush1.bf16.msra.mxu0 %v531
        %556 = vmatprep.subr.bf16.mxu0 0
        %557 = vmatpush1.bf16.msra.mxu0 0
        %558 = vmatprep.subr.bf16.mxu0 0
        %559 = vmatpush1.bf16.msra.mxu0 0
        %560 = vmatprep.subr.bf16.mxu0 0
        %561 = vmatpush1.bf16.msra.mxu0 0
        %562 = vmatprep.subr.bf16.mxu0 0
        %563 = vmatpush1.bf16.msra.mxu0 0
        %564 = vmatprep.subr.bf16.mxu0 0
        %565 = vmatpush1.bf16.msra.mxu0 0
        %566 = vmatprep.subr.bf16.mxu0 0
        %567 = vmatpush1.bf16.msra.mxu0 0
        %568 = vmatprep.subr.bf16.mxu0 0
        %569 = vmatpush1.bf16.msra.mxu0 0
        %570 = vmatprep.subr.bf16.mxu0 0
        %571 = vmatpush1.bf16.msra.mxu0 0
        %572 = vmatprep.mubr.bf16.mxu0 0
        %573 = vmatmul.mubr.bf16.gmra.mrb[0].mxu0 %v475
        %v574 = vpop.f32.mrb[0].mxu0
        %v575 = vadd.f32 0.0, %v574
        %v576 = vpop.f32.mrb[0].mxu0
        %v577 = vpop.f32.mrb[0].mxu0
        %v578 = vpop.f32.mrb[0].mxu0
        %579 = vdwg.mxu0
        %v580 = vadd.f32 %v474, %v575
        %581 = vst [vmem:[#allocation2] sm:$0xff] %v580
        %p582 = scmp.eq.s32.totalorder %s23, 1
        // Predicated region
        $region57: #{tpu_custom_call.1} parent=39 // pred_check
          %p583 = pneg %p582
        $region58: #{tpu_custom_call.1} parent=39 // pred_check_branch
          %585 = sbr.rel (%p583) target = $region60
        $region59: #{tpu_custom_call.1} parent=39 // pred_region
          %v586 = vld [vmem:[#allocation2] sm:$0xff]
          %v587 = vld [vmem:[%s353] sm:$0x1]
          %v589 = vlaneseq
          %v590 = vshrl.u32 %v589, 7
          %v591 = vsub.s32 0, %v590
          %v592 = vrot.slane %v587, %v591
          %v594 = vadd.f32 %v586, %v592
          %595 = vst [vmem:[#allocation11] sm:$0xff] %v594
        $region60: #{tpu_custom_call.1} parent=39 // pred_fallthru
          _
        // Predicated region
        $region61: #{tpu_custom_call.1} parent=39 // pred_check
          %p596 = pneg %p175
        $region62: #{tpu_custom_call.1} parent=39 // pred_check_branch
          %598 = sbr.rel (%p596) target = $region64
        $region63: #{tpu_custom_call.1} parent=39 // pred_region
          %s600 = ssub.s32 128, 128
          %601 = vsyncadd [#allocation7], %s600
          %s603 = sshll.u32 [#allocation11], 4
          %s604 = int_to_ptr.vmem [resolvable:$true] %s603
          %606 = dma.vmem_to_hbm [thread:$0]  %s604, 128, %s6, [#allocation7]
        $region64: #{tpu_custom_call.1} parent=39 // pred_fallthru
          _
        // Predicated region
        $region65: #{tpu_custom_call.1} parent=39 // pred_check
          %p607 = pneg %p175
        $region66: #{tpu_custom_call.1} parent=39 // pred_check_branch
          %609 = sbr.rel (%p607) target = $region68
        $region67: #{tpu_custom_call.1} parent=39 // pred_region
          %610 = dma.done [#allocation7], 128
        $region68: #{tpu_custom_call.1} parent=39 // pred_fallthru
          _
      $region40: #{tpu_custom_call.1} parent=5 // pred_fallthru
        _
      %p611 = scmp.le.s32.totalorder 2, %s18
      // Predicated region
      $region69: #{tpu_custom_call.1} parent=5 // pred_check
        %p612 = pneg %p611
      $region70: #{tpu_custom_call.1} parent=5 // pred_check_branch
        %614 = sbr.rel (%p612) target = $region72
      $region71: #{tpu_custom_call.1} parent=5 // pred_region
        %s615 = ssub.s32 %s18, 2
      $region72: #{tpu_custom_call.1} parent=5 // pred_fallthru
        _
    $region6: #{tpu_custom_call.1} parent=1 // loop_footer
      %s22 = sadd.s32 1, %s18
    $region7: #{tpu_custom_call.1} parent=1 // loop_footer_branch
      %17 = sbr.rel target = $region3
    $region8: #{tpu_custom_call.1} parent=1 // loop_exit
      _
    %616 = vsyncpa [#allocation6], 1
    %s617 = scalar_lea.sflag [#allocation6], 1
    %618 = vsyncpa %s617, 1
    %619 = vsyncpa [#allocation9], 1
    %s620 = scalar_lea.sflag [#allocation9], 1
    %621 = vsyncpa %s620, 1
    %622 = vsyncpa [#allocation7], 1
    %s623 = scalar_lea.sflag [#allocation7], 1
    %624 = vsyncpa %s623, 1

</llo_original>
